<compile_context>
chip_gen: v6e
topology: v6e:2x2x1
jax: 0.10.0
libtpu: 0.0.40
codegen_flags: <defaults>
</compile_context>

<pallas_src>
import functools

import jax
import jax.numpy as jnp
from jax import lax
from jax.experimental import pallas as pl
from jax.experimental.pallas import tpu as pltpu

NEG_SLOPE = 0.1
BN_EPS = 1e-5

# Tap order k = (di+1)*3 + (dj+1); must match the fused-weight layout below.
_OFFSETS = tuple((di, dj) for di in (-1, 0, 1) for dj in (-1, 0, 1))


def basic_block_kernel(x_ref, w1_ref, b1_ref, w2_ref, b2_ref, m_ref, o_ref, *, H, W):
    # x_ref : (Cin, L)    f32   L = (#images in this block) * H * W, lane-dense
    # w1_ref: (C0, Cin)   bf16  BN-folded 1x1 conv weights
    # b1_ref: (C0, 1)     f32
    # w2_ref: (C1, 9*C0)  bf16  BN-folded 3x3 weights, column index = k*C0 + c0
    # b2_ref: (C1, 1)     f32
    # m_ref : (9, L)      f32   per-tap validity masks (also gate cross-image taps)
    # o_ref : (C1, L)     f32
    L = x_ref.shape[-1]

    x = x_ref[...]                                   # (Cin, L) f32 (residual path)

    # ---- CBLR #1: 1x1 conv (BN folded) on the MXU (bf16) + LeakyReLU(0.1) ----
    h = jnp.dot(w1_ref[...], x.astype(jnp.bfloat16),
                preferred_element_type=jnp.float32)
    h = h + b1_ref[...]                              # (C0, L) f32
    h = jnp.maximum(h, NEG_SLOPE * h)

    # ---- CBLR #2: 3x3 conv pad=1 -> 9 XLU lane rolls + one deep-K MXU matmul ----
    taps = []
    for k, (di, dj) in enumerate(_OFFSETS):
        s = di * W + dj                              # flattened spatial offset
        shifted = h if s == 0 else pltpu.roll(h, (-s) % L, axis=1)
        if s != 0:                                   # center tap is always valid
            shifted = shifted * m_ref[pl.ds(k, 1), :]
        taps.append(shifted)
    stacked = jnp.concatenate(taps, axis=0).astype(jnp.bfloat16)   # (9*C0, L)

    y = jnp.dot(w2_ref[...], stacked, preferred_element_type=jnp.float32)
    y = y + b2_ref[...]
    y = jnp.maximum(y, NEG_SLOPE * y)

    # residual (planes[1] == inplanes), all f32
    o_ref[...] = y + x


def basic_block_forward(x, w1_eff, b1_eff, w2_eff, b2_eff, *, lane_target=4096):
    """x: (N, Cin, H, W) f32. w1_eff: (C0, Cin). w2_eff: (C1, C0, 3, 3)."""
    N, Cin, H, W = x.shape
    C0 = w1_eff.shape[0]
    C1 = w2_eff.shape[0]
    assert C1 == Cin, "residual add requires planes[1] == inplanes"
    assert H >= 2 and W >= 2
    HW = H * W

    # Fold batch into the lane axis: lane p = n*HW + row*W + col.
    x_fold = x.reshape(N, Cin, HW).transpose(1, 0, 2).reshape(Cin, N * HW)

    # Images per grid block: largest divisor of N fitting the lane target
    # (lane block must be 128-divisible unless it covers the whole array).
    nb = 1
    for cand in range(1, N + 1):
        if N % cand == 0 and cand * HW <= max(lane_target, HW):
            nb = cand
    if nb < N and (nb * HW) % 128 != 0:
        nb = N
    L_blk = nb * HW
    # TODO(synk): at real darknet resolutions (e.g. 64x208x208) a whole-image
    # lane block exceeds the v7x VMEM budget; add a spatial (row-chunk) grid
    # axis with a +/-1-row halo instead of whole-image lane blocks.

    # bf16 MXU weights, f32 biases. Fused 3x3 weight: col = k*C0 + c0.
    w1b = w1_eff.astype(jnp.bfloat16)                               # (C0, Cin)
    w2b = (w2_eff.reshape(C1, C0, 9).transpose(0, 2, 1)
           .reshape(C1, 9 * C0).astype(jnp.bfloat16))               # (C1, 9*C0)
    b1c = b1_eff.reshape(C0, 1).astype(jnp.float32)
    b2c = b2_eff.reshape(C1, 1).astype(jnp.float32)

    # Hoisted per-tap boundary masks for one lane block (periodic per image, so
    # one block's masks are valid for every block of whole images).
    pix = jnp.arange(L_blk, dtype=jnp.int32) % HW
    row = pix // W
    col = pix % W
    mask_rows = []
    for (di, dj) in _OFFSETS:
        m = jnp.ones((L_blk,), dtype=bool)
        if di == -1:
            m = m & (row >= 1)
        elif di == 1:
            m = m & (row <= H - 2)
        if dj == -1:
            m = m & (col >= 1)
        elif dj == 1:
            m = m & (col <= W - 2)
        mask_rows.append(m)
    masks = jnp.stack(mask_rows, axis=0).astype(jnp.float32)        # (9, L_blk)

    kernel = functools.partial(basic_block_kernel, H=H, W=W)
    grid_spec = pltpu.PrefetchScalarGridSpec(
        num_scalar_prefetch=0,
        grid=(N // nb,),
        in_specs=[
            pl.BlockSpec((Cin, L_blk), lambda i: (0, i)),
            pl.BlockSpec((C0, Cin), lambda i: (0, 0)),
            pl.BlockSpec((C0, 1), lambda i: (0, 0)),
            pl.BlockSpec((C1, 9 * C0), lambda i: (0, 0)),
            pl.BlockSpec((C1, 1), lambda i: (0, 0)),
            pl.BlockSpec((9, L_blk), lambda i: (0, 0)),
        ],
        out_specs=pl.BlockSpec((C1, L_blk), lambda i: (0, i)),
    )
    out_fold = pl.pallas_call(
        kernel,
        out_shape=jax.ShapeDtypeStruct((C1, N * HW), jnp.float32),
        grid_spec=grid_spec,
        compiler_params=pltpu.CompilerParams(dimension_semantics=("parallel",)),
    )(x_fold, w1b, b1c, w2b, b2c, masks)

    return out_fold.reshape(C1, N, HW).transpose(1, 0, 2).reshape(N, C1, H, W)


def reference_forward(x, w1_eff, b1_eff, w2_eff, b2_eff):
    """Pure-JAX f32 reference of the same (BN-folded) forward pass."""
    h = jnp.einsum("nchw,dc->ndhw", x, w1_eff) + b1_eff[None, :, None, None]
    h = jnp.where(h >= 0, h, NEG_SLOPE * h)
    y = lax.conv_general_dilated(
        h, w2_eff, window_strides=(1, 1), padding=((1, 1), (1, 1)),
        dimension_numbers=("NCHW", "OIHW", "NCHW"))
    y = y + b2_eff[None, :, None, None]
    y = jnp.where(y >= 0, y, NEG_SLOPE * y)
    return y + x


if __name__ == "__main__":
    # Module config (small): inplanes=4, planes=(2, 4); input (N=2, C=4, H=W=16)
    inplanes, planes = 4, (2, 4)
    N, H, W = 2, 16, 16

    key = jax.random.PRNGKey(0)
    ks = jax.random.split(key, 11)

    # Deterministic synthetic parameters (shapes per nn.Conv2d / nn.BatchNorm2d)
    conv1_w = 0.1 * jax.random.normal(ks[0], (planes[0], inplanes, 1, 1), jnp.float32)
    bn1_gamma = 1.0 + 0.1 * jax.random.normal(ks[1], (planes[0],), jnp.float32)
    bn1_beta = 0.1 * jax.random.normal(ks[2], (planes[0],), jnp.float32)
    bn1_mean = 0.1 * jax.random.normal(ks[3], (planes[0],), jnp.float32)
    bn1_var = jnp.abs(jax.random.normal(ks[4], (planes[0],), jnp.float32)) + 0.5

    conv2_w = 0.1 * jax.random.normal(ks[5], (planes[1], planes[0], 3, 3), jnp.float32)
    bn2_gamma = 1.0 + 0.1 * jax.random.normal(ks[6], (planes[1],), jnp.float32)
    bn2_beta = 0.1 * jax.random.normal(ks[7], (planes[1],), jnp.float32)
    bn2_mean = 0.1 * jax.random.normal(ks[8], (planes[1],), jnp.float32)
    bn2_var = jnp.abs(jax.random.normal(ks[9], (planes[1],), jnp.float32)) + 0.5

    x = jax.random.normal(ks[10], (N, inplanes, H, W), jnp.float32)

    # Fold BatchNorm (eval mode: running stats) into the conv weights/bias (glue).
    scale1 = bn1_gamma / jnp.sqrt(bn1_var + BN_EPS)
    w1_eff = conv1_w[:, :, 0, 0] * scale1[:, None]            # (C0, Cin)
    b1_eff = bn1_beta - bn1_mean * scale1                      # (C0,)

    scale2 = bn2_gamma / jnp.sqrt(bn2_var + BN_EPS)
    w2_eff = conv2_w * scale2[:, None, None, None]             # (C1, C0, 3, 3)
    b2_eff = bn2_beta - bn2_mean * scale2                      # (C1,)

    out = basic_block_forward(x, w1_eff, b1_eff, w2_eff, b2_eff)
    out = jax.block_until_ready(out)

    ref = reference_forward(x, w1_eff, b1_eff, w2_eff, b2_eff)
    assert out.shape == (N, inplanes, H, W)
    # Tolerance loosened for bf16 MXU operands (accumulation/residual stay f32).
    assert jnp.allclose(out, ref, rtol=2e-2, atol=2e-2), "mismatch vs JAX reference"

    print("KERNEL_OK")
</pallas_src>

<mosaic_0001>
module attributes {stable_mosaic.version = 11 : i64} {
  func.func @basic_block_kernel(%arg0: i32, %arg1: memref<4x512xf32, #tpu.memory_space<vmem>>, %arg2: memref<2x4xbf16, #tpu.memory_space<vmem>>, %arg3: memref<2x1xf32, #tpu.memory_space<vmem>>, %arg4: memref<4x18xbf16, #tpu.memory_space<vmem>>, %arg5: memref<4x1xf32, #tpu.memory_space<vmem>>, %arg6: memref<9x512xf32, #tpu.memory_space<vmem>>, %arg7: memref<4x512xf32, #tpu.memory_space<vmem>>) attributes {dimension_semantics = [#tpu.dimension_semantics<parallel>], iteration_bounds = array<i64: 1>, scalar_prefetch = 0 : i64, scratch_operands = 0 : i64, tpu.core_type = #tpu.core_type<tc>, window_params = [{transform_indices = @transform_0, window_bounds = array<i64: 4, 512>}, {pipeline_mode = #tpu.pipeline_mode<synchronous>, transform_indices = @transform_1, window_bounds = array<i64: 2, 4>}, {pipeline_mode = #tpu.pipeline_mode<synchronous>, transform_indices = @transform_2, window_bounds = array<i64: 2, 1>}, {pipeline_mode = #tpu.pipeline_mode<synchronous>, transform_indices = @transform_3, window_bounds = array<i64: 4, 18>}, {pipeline_mode = #tpu.pipeline_mode<synchronous>, transform_indices = @transform_4, window_bounds = array<i64: 4, 1>}, {pipeline_mode = #tpu.pipeline_mode<synchronous>, transform_indices = @transform_5, window_bounds = array<i64: 9, 512>}, {transform_indices = @transform_6, window_bounds = array<i64: 4, 512>}]} {
    %c0 = arith.constant 0 : index
    %c0_0 = arith.constant 0 : index
    %0 = vector.load %arg1[%c0, %c0_0] : memref<4x512xf32, #tpu.memory_space<vmem>>, vector<4x512xf32>
    %c0_1 = arith.constant 0 : index
    %c0_2 = arith.constant 0 : index
    %1 = vector.load %arg2[%c0_1, %c0_2] : memref<2x4xbf16, #tpu.memory_space<vmem>>, vector<2x4xbf16>
    %2 = arith.truncf %0 : vector<4x512xf32> to vector<4x512xbf16>
    %cst = arith.constant dense<0.000000e+00> : vector<2x512xf32>
    %3 = tpu.matmul %1, %2, %cst {dimension_numbers = #tpu.dot_dimension_numbers<[1], [0], [0], [1], [0, 0, 1, 1], [], []>} : vector<2x4xbf16>, vector<4x512xbf16>, vector<2x512xf32> -> vector<2x512xf32>
    %c0_3 = arith.constant 0 : index
    %c0_4 = arith.constant 0 : index
    %4 = vector.load %arg3[%c0_3, %c0_4] : memref<2x1xf32, #tpu.memory_space<vmem>>, vector<2x1xf32>
    %5 = vector.broadcast %4 : vector<2x1xf32> to vector<2x512xf32>
    %6 = arith.addf %3, %5 : vector<2x512xf32>
    %cst_5 = arith.constant 1.000000e-01 : f32
    %7 = vector.broadcast %cst_5 : f32 to vector<2x512xf32>
    %8 = arith.mulf %7, %6 : vector<2x512xf32>
    %9 = arith.maximumf %6, %8 : vector<2x512xf32>
    %c17_i32 = arith.constant 17 : i32
    %10 = tpu.dynamic_rotate %9 by %c17_i32 dim 1 : vector<2x512xf32>, i32 -> vector<2x512xf32>
    %c0_6 = arith.constant 0 : index
    %c0_7 = arith.constant 0 : index
    %11 = vector.load %arg6[%c0_6, %c0_7] : memref<9x512xf32, #tpu.memory_space<vmem>>, vector<1x512xf32>
    %12 = vector.broadcast %11 : vector<1x512xf32> to vector<2x512xf32>
    %13 = arith.mulf %10, %12 : vector<2x512xf32>
    %c16_i32 = arith.constant 16 : i32
    %14 = tpu.dynamic_rotate %9 by %c16_i32 dim 1 : vector<2x512xf32>, i32 -> vector<2x512xf32>
    %c1 = arith.constant 1 : index
    %c0_8 = arith.constant 0 : index
    %15 = vector.load %arg6[%c1, %c0_8] : memref<9x512xf32, #tpu.memory_space<vmem>>, vector<1x512xf32>
    %16 = vector.broadcast %15 : vector<1x512xf32> to vector<2x512xf32>
    %17 = arith.mulf %14, %16 : vector<2x512xf32>
    %c15_i32 = arith.constant 15 : i32
    %18 = tpu.dynamic_rotate %9 by %c15_i32 dim 1 : vector<2x512xf32>, i32 -> vector<2x512xf32>
    %c2 = arith.constant 2 : index
    %c0_9 = arith.constant 0 : index
    %19 = vector.load %arg6[%c2, %c0_9] : memref<9x512xf32, #tpu.memory_space<vmem>>, vector<1x512xf32>
    %20 = vector.broadcast %19 : vector<1x512xf32> to vector<2x512xf32>
    %21 = arith.mulf %18, %20 : vector<2x512xf32>
    %c1_i32 = arith.constant 1 : i32
    %22 = tpu.dynamic_rotate %9 by %c1_i32 dim 1 : vector<2x512xf32>, i32 -> vector<2x512xf32>
    %c3 = arith.constant 3 : index
    %c0_10 = arith.constant 0 : index
    %23 = vector.load %arg6[%c3, %c0_10] : memref<9x512xf32, #tpu.memory_space<vmem>>, vector<1x512xf32>
    %24 = vector.broadcast %23 : vector<1x512xf32> to vector<2x512xf32>
    %25 = arith.mulf %22, %24 : vector<2x512xf32>
    %c511_i32 = arith.constant 511 : i32
    %26 = tpu.dynamic_rotate %9 by %c511_i32 dim 1 : vector<2x512xf32>, i32 -> vector<2x512xf32>
    %c5 = arith.constant 5 : index
    %c0_11 = arith.constant 0 : index
    %27 = vector.load %arg6[%c5, %c0_11] : memref<9x512xf32, #tpu.memory_space<vmem>>, vector<1x512xf32>
    %28 = vector.broadcast %27 : vector<1x512xf32> to vector<2x512xf32>
    %29 = arith.mulf %26, %28 : vector<2x512xf32>
    %c497_i32 = arith.constant 497 : i32
    %30 = tpu.dynamic_rotate %9 by %c497_i32 dim 1 : vector<2x512xf32>, i32 -> vector<2x512xf32>
    %c6 = arith.constant 6 : index
    %c0_12 = arith.constant 0 : index
    %31 = vector.load %arg6[%c6, %c0_12] : memref<9x512xf32, #tpu.memory_space<vmem>>, vector<1x512xf32>
    %32 = vector.broadcast %31 : vector<1x512xf32> to vector<2x512xf32>
    %33 = arith.mulf %30, %32 : vector<2x512xf32>
    %c496_i32 = arith.constant 496 : i32
    %34 = tpu.dynamic_rotate %9 by %c496_i32 dim 1 : vector<2x512xf32>, i32 -> vector<2x512xf32>
    %c7 = arith.constant 7 : index
    %c0_13 = arith.constant 0 : index
    %35 = vector.load %arg6[%c7, %c0_13] : memref<9x512xf32, #tpu.memory_space<vmem>>, vector<1x512xf32>
    %36 = vector.broadcast %35 : vector<1x512xf32> to vector<2x512xf32>
    %37 = arith.mulf %34, %36 : vector<2x512xf32>
    %c495_i32 = arith.constant 495 : i32
    %38 = tpu.dynamic_rotate %9 by %c495_i32 dim 1 : vector<2x512xf32>, i32 -> vector<2x512xf32>
    %c8 = arith.constant 8 : index
    %c0_14 = arith.constant 0 : index
    %39 = vector.load %arg6[%c8, %c0_14] : memref<9x512xf32, #tpu.memory_space<vmem>>, vector<1x512xf32>
    %40 = vector.broadcast %39 : vector<1x512xf32> to vector<2x512xf32>
    %41 = arith.mulf %38, %40 : vector<2x512xf32>
    %42 = tpu.concatenate %13, %17, %21, %25, %9, %29, %33, %37, %41 in 0 : vector<2x512xf32>, vector<2x512xf32>, vector<2x512xf32>, vector<2x512xf32>, vector<2x512xf32>, vector<2x512xf32>, vector<2x512xf32>, vector<2x512xf32>, vector<2x512xf32> -> vector<18x512xf32>
    %43 = arith.truncf %42 : vector<18x512xf32> to vector<18x512xbf16>
    %c0_15 = arith.constant 0 : index
    %c0_16 = arith.constant 0 : index
    %44 = vector.load %arg4[%c0_15, %c0_16] : memref<4x18xbf16, #tpu.memory_space<vmem>>, vector<4x18xbf16>
    %cst_17 = arith.constant dense<0.000000e+00> : vector<4x512xf32>
    %45 = tpu.matmul %44, %43, %cst_17 {dimension_numbers = #tpu.dot_dimension_numbers<[1], [0], [0], [1], [0, 0, 1, 1], [], []>} : vector<4x18xbf16>, vector<18x512xbf16>, vector<4x512xf32> -> vector<4x512xf32>
    %c0_18 = arith.constant 0 : index
    %c0_19 = arith.constant 0 : index
    %46 = vector.load %arg5[%c0_18, %c0_19] : memref<4x1xf32, #tpu.memory_space<vmem>>, vector<4x1xf32>
    %47 = vector.broadcast %46 : vector<4x1xf32> to vector<4x512xf32>
    %48 = arith.addf %45, %47 : vector<4x512xf32>
    %cst_20 = arith.constant 1.000000e-01 : f32
    %49 = vector.broadcast %cst_20 : f32 to vector<4x512xf32>
    %50 = arith.mulf %49, %48 : vector<4x512xf32>
    %51 = arith.maximumf %48, %50 : vector<4x512xf32>
    %52 = arith.addf %51, %0 : vector<4x512xf32>
    %c0_21 = arith.constant 0 : index
    %c0_22 = arith.constant 0 : index
    %53 = vector.load %arg7[%c0_21, %c0_22] : memref<4x512xf32, #tpu.memory_space<vmem>>, vector<4x512xf32>
    tpu.vector_store %arg7[%c0_21, %c0_22], %52 {strides = array<i32>} : memref<4x512xf32, #tpu.memory_space<vmem>>, vector<4x512xf32>,
    return
  }
  func.func @transform_0(%arg0: i32) -> (i32, i32) {
    %c0_i32 = arith.constant 0 : i32
    %c0_i32_0 = arith.constant 0 : i32
    return %c0_i32, %arg0 : i32, i32
  }
  func.func @transform_1(%arg0: i32) -> (i32, i32) {
    %c0_i32 = arith.constant 0 : i32
    %c0_i32_0 = arith.constant 0 : i32
    %c0_i32_1 = arith.constant 0 : i32
    return %c0_i32, %c0_i32_0 : i32, i32
  }
  func.func @transform_2(%arg0: i32) -> (i32, i32) {
    %c0_i32 = arith.constant 0 : i32
    %c0_i32_0 = arith.constant 0 : i32
    %c0_i32_1 = arith.constant 0 : i32
    return %c0_i32, %c0_i32_0 : i32, i32
  }
  func.func @transform_3(%arg0: i32) -> (i32, i32) {
    %c0_i32 = arith.constant 0 : i32
    %c0_i32_0 = arith.constant 0 : i32
    %c0_i32_1 = arith.constant 0 : i32
    return %c0_i32, %c0_i32_0 : i32, i32
  }
  func.func @transform_4(%arg0: i32) -> (i32, i32) {
    %c0_i32 = arith.constant 0 : i32
    %c0_i32_0 = arith.constant 0 : i32
    %c0_i32_1 = arith.constant 0 : i32
    return %c0_i32, %c0_i32_0 : i32, i32
  }
  func.func @transform_5(%arg0: i32) -> (i32, i32) {
    %c0_i32 = arith.constant 0 : i32
    %c0_i32_0 = arith.constant 0 : i32
    %c0_i32_1 = arith.constant 0 : i32
    return %c0_i32, %c0_i32_0 : i32, i32
  }
  func.func @transform_6(%arg0: i32) -> (i32, i32) {
    %c0_i32 = arith.constant 0 : i32
    %c0_i32_0 = arith.constant 0 : i32
    return %c0_i32, %arg0 : i32, i32
  }
}

</mosaic_0001>

<llo_original>
// kernel: tpu_custom_call.1
$region0: #{tpu_custom_call.1}
  #allocation0 [shape = 'u32[]', space=smem, size = 0x4, offset = 0x4, fixed_abs, tag = 'smem constant byte address 0x4 - core index']
  #allocation1 [shape = 'u32[144,128]{1,0:T(1,128)}', space=vmem, size = 0x12000, scoped, tag = 'internal scratch']
  %s0 = inlined_call_operand.hbm [shape: f32[4,512], index: 0, kind: input, shape index: {}]
  %s1 = inlined_call_operand.vmem [shape: bf16[2,4], index: 1, kind: input, shape index: {}]
  %s2 = inlined_call_operand.vmem [shape: f32[2,1], index: 2, kind: input, shape index: {}]
  %s3 = inlined_call_operand.vmem [shape: bf16[4,18], index: 3, kind: input, shape index: {}]
  %s4 = inlined_call_operand.vmem [shape: f32[4,1], index: 4, kind: input, shape index: {}]
  %s5 = inlined_call_operand.hbm [shape: f32[9,512], index: 5, kind: input, shape index: {}]
  %s6 = inlined_call_operand.hbm [shape: f32[4,512], index: 6, kind: output, shape index: {}]
  %s7 = sld [smem:[#allocation0]]
  $region42: #{tpu_custom_call.1} parent=0
    _
  %s9 = ssub.s32 1, %s7
  %s10 = scalar_select 0, %s9, %s7
  $region1: #{tpu_custom_call.1} parent=0
    #allocation2 [shape = 'u8[8192]{0}', space=vmem, size = 0x2000, scoped, tag = 'input window, operand 0, single buffered']
    #allocation3 [shape = 's32[1]{0}', space=sflag, size = 0x4, scoped, tag = 'scoped memory for tpu_custom_call.1']
    #allocation4 [shape = 's32[1]{0}', space=sflag, size = 0x4, scoped, tag = 'scoped memory for tpu_custom_call.1']
    #allocation5 [shape = 'u8[32768]{0}', space=vmem, size = 0x8000, scoped, tag = 'input window, operand 5, single buffered']
    #allocation6 [shape = 's32[1]{0}', space=sflag, size = 0x4, scoped, tag = 'scoped memory for tpu_custom_call.1']
    #allocation7 [shape = 'u8[8192]{0}', space=vmem, size = 0x2000, scoped, tag = 'output window, operand 0, single buffered']
    %11 = vsyncpa [#allocation3], 0
    %12 = vsyncpa [#allocation6], 0
    %13 = vsyncpa [#allocation4], 0
    // Predicated region
    $region2: #{tpu_custom_call.1} parent=1 // pred_check
      _
    $region3: #{tpu_custom_call.1} parent=1 // pred_check_branch
      %15 = sbr.rel (0) target = $region5
    $region4: #{tpu_custom_call.1} parent=1 // pred_region
      %s17 = ssub.s32 256, 256
      %18 = vsyncadd [#allocation3], %s17
      %s20 = sshll.u32 [#allocation2], 4
      %s21 = int_to_ptr.vmem [resolvable:$true] %s20
      %23 = dma.hbm_to_vmem [thread:$0]  %s0, 256, %s21, [#allocation3]
    $region5: #{tpu_custom_call.1} parent=1 // pred_fallthru
      _
    // Predicated region
    $region6: #{tpu_custom_call.1} parent=1 // pred_check
      _
    $region7: #{tpu_custom_call.1} parent=1 // pred_check_branch
      %25 = sbr.rel (0) target = $region9
    $region8: #{tpu_custom_call.1} parent=1 // pred_region
      _
    $region9: #{tpu_custom_call.1} parent=1 // pred_fallthru
      _
    // Predicated region
    $region10: #{tpu_custom_call.1} parent=1 // pred_check
      _
    $region11: #{tpu_custom_call.1} parent=1 // pred_check_branch
      %27 = sbr.rel (0) target = $region13
    $region12: #{tpu_custom_call.1} parent=1 // pred_region
      _
    $region13: #{tpu_custom_call.1} parent=1 // pred_fallthru
      _
    // Predicated region
    $region14: #{tpu_custom_call.1} parent=1 // pred_check
      _
    $region15: #{tpu_custom_call.1} parent=1 // pred_check_branch
      %29 = sbr.rel (0) target = $region17
    $region16: #{tpu_custom_call.1} parent=1 // pred_region
      _
    $region17: #{tpu_custom_call.1} parent=1 // pred_fallthru
      _
    // Predicated region
    $region18: #{tpu_custom_call.1} parent=1 // pred_check
      _
    $region19: #{tpu_custom_call.1} parent=1 // pred_check_branch
      %31 = sbr.rel (0) target = $region21
    $region20: #{tpu_custom_call.1} parent=1 // pred_region
      _
    $region21: #{tpu_custom_call.1} parent=1 // pred_fallthru
      _
    // Predicated region
    $region22: #{tpu_custom_call.1} parent=1 // pred_check
      _
    $region23: #{tpu_custom_call.1} parent=1 // pred_check_branch
      %33 = sbr.rel (0) target = $region25
    $region24: #{tpu_custom_call.1} parent=1 // pred_region
      %s35 = ssub.s32 1024, 1024
      %36 = vsyncadd [#allocation6], %s35
      %s37 = sshll.u32 [#allocation5], 4
      %s38 = int_to_ptr.vmem [resolvable:$true] %s37
      %43 = dma.hbm_to_vmem [thread:$0]  %s5, 1024, %s38, [#allocation6], 512, 512, 32
    $region25: #{tpu_custom_call.1} parent=1 // pred_fallthru
      _
    // Predicated region
    $region26: #{tpu_custom_call.1} parent=1 // pred_check
      _
    $region27: #{tpu_custom_call.1} parent=1 // pred_check_branch
      %45 = sbr.rel (0) target = $region29
    $region28: #{tpu_custom_call.1} parent=1 // pred_region
      %46 = dma.done [#allocation3], 256
    $region29: #{tpu_custom_call.1} parent=1 // pred_fallthru
      _
    // Predicated region
    $region30: #{tpu_custom_call.1} parent=1 // pred_check
      _
    $region31: #{tpu_custom_call.1} parent=1 // pred_check_branch
      %48 = sbr.rel (0) target = $region33
    $region32: #{tpu_custom_call.1} parent=1 // pred_region
      %49 = dma.done [#allocation6], 1024
    $region33: #{tpu_custom_call.1} parent=1 // pred_fallthru
      _
    %v51 = vld [vmem:[#allocation2] sm:$0xff]
    %v52 = vld [vmem:[#allocation2 + $0x8] sm:$0xff]
    %v53 = vld [vmem:[%s1] sm:$0x1]
    %v56 = vcombine.high %v51, %v51
    %v57 = vcombine.high %v52, %v52
    %v60 = vpack.c.bf16 %v51, %v51
    %v61 = vpack.c.bf16 %v56, %v56
    %v62 = vpack.c.bf16 %v52, %v52
    %v63 = vpack.c.bf16 %v57, %v57
    %v64 = vld [vmem:[%s2] sm:$0x3]
    %66 = vset.pattern.permute.xlu0 0
    %67 = vperm.xlu0 %66, %v64
    %v68 = vpop.permute.xlu0 %67
    %vm70 = vcmask 31744
    %v72 = vsel %vm70, %v53, 0
    %vm74 = vcmask 1041408
    %v76 = vsel %vm74, %v60, 0
    %v79 = vsel %vm74, %v61, 0
    %v82 = vsel %vm74, %v62, 0
    %v85 = vsel %vm74, %v63, 0
    %87 = vmatprep.subr.bf16.mxu0 0
    %88 = vmatpush1.bf16.msra.mxu0 0
    %89 = vmatprep.subr.bf16.mxu0 0
    %90 = vmatpush1.bf16.msra.mxu0 0
    %91 = vmatprep.subr.bf16.mxu0 0
    %92 = vmatpush1.bf16.msra.mxu0 0
    %93 = vmatprep.subr.bf16.mxu0 0
    %94 = vmatpush1.bf16.msra.mxu0 0
    %95 = vmatprep.subr.bf16.mxu0 0
    %96 = vmatpush1.bf16.msra.mxu0 0
    %97 = vmatprep.subr.bf16.mxu0 0
    %98 = vmatpush1.bf16.msra.mxu0 0
    %99 = vmatprep.subr.bf16.mxu0 0
    %100 = vmatpush1.bf16.msra.mxu0 0
    %101 = vmatprep.subr.bf16.mxu0 %v79
    %102 = vmatpush1.bf16.msra.mxu0 %v76
    %103 = vmatprep.subr.bf16.mxu0 0
    %104 = vmatpush2.bf16.msra.mxu0 0
    %105 = vmatprep.subr.bf16.mxu0 0
    %106 = vmatpush2.bf16.msra.mxu0 0
    %107 = vmatprep.subr.bf16.mxu0 0
    %108 = vmatpush2.bf16.msra.mxu0 0
    %109 = vmatprep.subr.bf16.mxu0 0
    %110 = vmatpush2.bf16.msra.mxu0 0
    %111 = vmatprep.subr.bf16.mxu0 0
    %112 = vmatpush2.bf16.msra.mxu0 0
    %113 = vmatprep.subr.bf16.mxu0 0
    %114 = vmatpush2.bf16.msra.mxu0 0
    %115 = vmatprep.subr.bf16.mxu0 0
    %116 = vmatpush2.bf16.msra.mxu0 0
    %117 = vmatprep.subr.bf16.mxu0 0
    %118 = vmatpush2.bf16.msra.mxu0 0
    %119 = vmatprep.mubr.bf16.mxu0 0
    %120 = vmatmul.mubr.bf16.gmra.mxu0 %v72
    %v121 = vpop.f32.mrf.mxu0
    %v122 = vadd.f32 %v68, %v121
    %v123 = vpop.f32.mrf.mxu0
    %v124 = vadd.f32 %v68, %v123
    %v125 = vpop.f32.mrf.mxu0
    %v126 = vpop.f32.mrf.mxu0
    %127 = vdwg.mxu0
    %128 = vmatprep.subr.bf16.mxu0 0
    %129 = vmatpush1.bf16.msra.mxu0 0
    %130 = vmatprep.subr.bf16.mxu0 0
    %131 = vmatpush1.bf16.msra.mxu0 0
    %132 = vmatprep.subr.bf16.mxu0 0
    %133 = vmatpush1.bf16.msra.mxu0 0
    %134 = vmatprep.subr.bf16.mxu0 0
    %135 = vmatpush1.bf16.msra.mxu0 0
    %136 = vmatprep.subr.bf16.mxu0 0
    %137 = vmatpush1.bf16.msra.mxu0 0
    %138 = vmatprep.subr.bf16.mxu0 0
    %139 = vmatpush1.bf16.msra.mxu0 0
    %140 = vmatprep.subr.bf16.mxu0 0
    %141 = vmatpush1.bf16.msra.mxu0 0
    %142 = vmatprep.subr.bf16.mxu0 %v85
    %143 = vmatpush1.bf16.msra.mxu0 %v82
    %144 = vmatprep.subr.bf16.mxu0 0
    %145 = vmatpush2.bf16.msra.mxu0 0
    %146 = vmatprep.subr.bf16.mxu0 0
    %147 = vmatpush2.bf16.msra.mxu0 0
    %148 = vmatprep.subr.bf16.mxu0 0
    %149 = vmatpush2.bf16.msra.mxu0 0
    %150 = vmatprep.subr.bf16.mxu0 0
    %151 = vmatpush2.bf16.msra.mxu0 0
    %152 = vmatprep.subr.bf16.mxu0 0
    %153 = vmatpush2.bf16.msra.mxu0 0
    %154 = vmatprep.subr.bf16.mxu0 0
    %155 = vmatpush2.bf16.msra.mxu0 0
    %156 = vmatprep.subr.bf16.mxu0 0
    %157 = vmatpush2.bf16.msra.mxu0 0
    %158 = vmatprep.subr.bf16.mxu0 0
    %159 = vmatpush2.bf16.msra.mxu0 0
    %160 = vmatprep.mubr.bf16.mxu0 0
    %161 = vmatmul.mubr.bf16.gmra.mxu0 %v72
    %v162 = vpop.f32.mrf.mxu0
    %v163 = vadd.f32 %v68, %v162
    %v164 = vpop.f32.mrf.mxu0
    %v165 = vadd.f32 %v68, %v164
    %v166 = vpop.f32.mrf.mxu0
    %v167 = vpop.f32.mrf.mxu0
    %168 = vdwg.mxu0
    %v169 = vmul.f32 %v122, 0.1
    %v170 = vmul.f32 %v124, 0.1
    %v171 = vmul.f32 %v163, 0.1
    %v172 = vmul.f32 %v165, 0.1
    %v173 = vmax.f32 %v122, %v169
    %v174 = vmax.f32 %v124, %v170
    %v175 = vmax.f32 %v163, %v171
    %v176 = vmax.f32 %v165, %v172
    %177 = vrot.lane.b32.xlu0 %v173, 17
    %v178 = vpop.permute.xlu0 %177
    %179 = vrot.lane.b32.xlu0 %v174, 17
    %v180 = vpop.permute.xlu0 %179
    %181 = vrot.lane.b32.xlu0 %v175, 17
    %v182 = vpop.permute.xlu0 %181
    %183 = vrot.lane.b32.xlu0 %v176, 17
    %v184 = vpop.permute.xlu0 %183
    %v185 = vlaneseq
    %v186 = vand.u32 %v185, 127
    %vm187 = vcmp.lt.s32.totalorder %v186, 17
    %v188 = vsel %vm187, %v182, %v184
    %v189 = vsel %vm187, %v180, %v182
    %v190 = vsel %vm187, %v178, %v180
    %v191 = vsel %vm187, %v184, %v178
    %v192 = vld [vmem:[#allocation5] ss:$8 sm:$0xf]
    %v194 = vlaneseq
    %v195 = vshrl.u32 %v194, 7
    %v196 = vsub.s32 0, %v195
    %v197 = vrot.slane %v192, %v196
    %v198 = vlaneseq
    %v199 = vshrl.u32 %v198, 7
    %v200 = vsub.s32 1, %v199
    %v201 = vrot.slane %v192, %v200
    %v202 = vlaneseq
    %v203 = vshrl.u32 %v202, 7
    %v204 = vsub.s32 2, %v203
    %v205 = vrot.slane %v192, %v204
    %v206 = vlaneseq
    %v207 = vshrl.u32 %v206, 7
    %v208 = vsub.s32 3, %v207
    %v209 = vrot.slane %v192, %v208
    %v214 = vmul.f32 %v191, %v197
    %v215 = vmul.f32 %v190, %v201
    %v216 = vmul.f32 %v189, %v205
    %v217 = vmul.f32 %v188, %v209
    %218 = vrot.lane.b32.xlu0 %v173, 16
    %v219 = vpop.permute.xlu0 %218
    %220 = vrot.lane.b32.xlu0 %v174, 16
    %v221 = vpop.permute.xlu0 %220
    %222 = vrot.lane.b32.xlu0 %v175, 16
    %v223 = vpop.permute.xlu0 %222
    %224 = vrot.lane.b32.xlu0 %v176, 16
    %v225 = vpop.permute.xlu0 %224
    %vm226 = vcmp.lt.s32.totalorder %v186, 16
    %v227 = vsel %vm226, %v223, %v225
    %v228 = vsel %vm226, %v221, %v223
    %v229 = vsel %vm226, %v219, %v221
    %v230 = vsel %vm226, %v225, %v219
    %s231 = scalar_lea.vmem [#allocation5], 1
    %v232 = vld [vmem:[%s231] ss:$8 sm:$0xf]
    %v234 = vlaneseq
    %v235 = vshrl.u32 %v234, 7
    %v236 = vsub.s32 0, %v235
    %v237 = vrot.slane %v232, %v236
    %v238 = vlaneseq
    %v239 = vshrl.u32 %v238, 7
    %v240 = vsub.s32 1, %v239
    %v241 = vrot.slane %v232, %v240
    %v242 = vlaneseq
    %v243 = vshrl.u32 %v242, 7
    %v244 = vsub.s32 2, %v243
    %v245 = vrot.slane %v232, %v244
    %v246 = vlaneseq
    %v247 = vshrl.u32 %v246, 7
    %v248 = vsub.s32 3, %v247
    %v249 = vrot.slane %v232, %v248
    %v254 = vmul.f32 %v230, %v237
    %v255 = vmul.f32 %v229, %v241
    %v256 = vmul.f32 %v228, %v245
    %v257 = vmul.f32 %v227, %v249
    %258 = vrot.lane.b32.xlu0 %v173, 15
    %v259 = vpop.permute.xlu0 %258
    %260 = vrot.lane.b32.xlu0 %v174, 15
    %v261 = vpop.permute.xlu0 %260
    %262 = vrot.lane.b32.xlu0 %v175, 15
    %v263 = vpop.permute.xlu0 %262
    %264 = vrot.lane.b32.xlu0 %v176, 15
    %v265 = vpop.permute.xlu0 %264
    %vm266 = vcmp.lt.s32.totalorder %v186, 15
    %v267 = vsel %vm266, %v263, %v265
    %v268 = vsel %vm266, %v261, %v263
    %v269 = vsel %vm266, %v259, %v261
    %v270 = vsel %vm266, %v265, %v259
    %s271 = scalar_lea.vmem [#allocation5], 2
    %v272 = vld [vmem:[%s271] ss:$8 sm:$0xf]
    %v274 = vlaneseq
    %v275 = vshrl.u32 %v274, 7
    %v276 = vsub.s32 0, %v275
    %v277 = vrot.slane %v272, %v276
    %v278 = vlaneseq
    %v279 = vshrl.u32 %v278, 7
    %v280 = vsub.s32 1, %v279
    %v281 = vrot.slane %v272, %v280
    %v282 = vlaneseq
    %v283 = vshrl.u32 %v282, 7
    %v284 = vsub.s32 2, %v283
    %v285 = vrot.slane %v272, %v284
    %v286 = vlaneseq
    %v287 = vshrl.u32 %v286, 7
    %v288 = vsub.s32 3, %v287
    %v289 = vrot.slane %v272, %v288
    %v294 = vmul.f32 %v270, %v277
    %v295 = vmul.f32 %v269, %v281
    %v296 = vmul.f32 %v268, %v285
    %v297 = vmul.f32 %v267, %v289
    %298 = vrot.lane.b32.xlu0 %v173, 1
    %v299 = vpop.permute.xlu0 %298
    %300 = vrot.lane.b32.xlu0 %v174, 1
    %v301 = vpop.permute.xlu0 %300
    %302 = vrot.lane.b32.xlu0 %v175, 1
    %v303 = vpop.permute.xlu0 %302
    %304 = vrot.lane.b32.xlu0 %v176, 1
    %v305 = vpop.permute.xlu0 %304
    %vm306 = vcmp.lt.s32.totalorder %v186, 1
    %v307 = vsel %vm306, %v303, %v305
    %v308 = vsel %vm306, %v301, %v303
    %v309 = vsel %vm306, %v299, %v301
    %v310 = vsel %vm306, %v305, %v299
    %s311 = scalar_lea.vmem [#allocation5], 3
    %v312 = vld [vmem:[%s311] ss:$8 sm:$0xf]
    %v314 = vlaneseq
    %v315 = vshrl.u32 %v314, 7
    %v316 = vsub.s32 0, %v315
    %v317 = vrot.slane %v312, %v316
    %v318 = vlaneseq
    %v319 = vshrl.u32 %v318, 7
    %v320 = vsub.s32 1, %v319
    %v321 = vrot.slane %v312, %v320
    %v322 = vlaneseq
    %v323 = vshrl.u32 %v322, 7
    %v324 = vsub.s32 2, %v323
    %v325 = vrot.slane %v312, %v324
    %v326 = vlaneseq
    %v327 = vshrl.u32 %v326, 7
    %v328 = vsub.s32 3, %v327
    %v329 = vrot.slane %v312, %v328
    %v334 = vmul.f32 %v310, %v317
    %v335 = vmul.f32 %v309, %v321
    %v336 = vmul.f32 %v308, %v325
    %v337 = vmul.f32 %v307, %v329
    %338 = vrot.lane.b32.xlu0 %v173, 127
    %v339 = vpop.permute.xlu0 %338
    %340 = vrot.lane.b32.xlu0 %v174, 127
    %v341 = vpop.permute.xlu0 %340
    %342 = vrot.lane.b32.xlu0 %v175, 127
    %v343 = vpop.permute.xlu0 %342
    %344 = vrot.lane.b32.xlu0 %v176, 127
    %v345 = vpop.permute.xlu0 %344
    %vm346 = vcmp.lt.s32.totalorder %v186, 127
    %v347 = vsel %vm346, %v343, %v345
    %v348 = vsel %vm346, %v341, %v343
    %v349 = vsel %vm346, %v339, %v341
    %v350 = vsel %vm346, %v345, %v339
    %s351 = scalar_lea.vmem [#allocation5], 5
    %v352 = vld [vmem:[%s351] ss:$8 sm:$0xf]
    %v354 = vlaneseq
    %v355 = vshrl.u32 %v354, 7
    %v356 = vsub.s32 0, %v355
    %v357 = vrot.slane %v352, %v356
    %v358 = vlaneseq
    %v359 = vshrl.u32 %v358, 7
    %v360 = vsub.s32 1, %v359
    %v361 = vrot.slane %v352, %v360
    %v362 = vlaneseq
    %v363 = vshrl.u32 %v362, 7
    %v364 = vsub.s32 2, %v363
    %v365 = vrot.slane %v352, %v364
    %v366 = vlaneseq
    %v367 = vshrl.u32 %v366, 7
    %v368 = vsub.s32 3, %v367
    %v369 = vrot.slane %v352, %v368
    %v374 = vmul.f32 %v349, %v357
    %v375 = vmul.f32 %v348, %v361
    %v376 = vmul.f32 %v347, %v365
    %v377 = vmul.f32 %v350, %v369
    %378 = vrot.lane.b32.xlu0 %v173, 113
    %v379 = vpop.permute.xlu0 %378
    %380 = vrot.lane.b32.xlu0 %v174, 113
    %v381 = vpop.permute.xlu0 %380
    %382 = vrot.lane.b32.xlu0 %v175, 113
    %v383 = vpop.permute.xlu0 %382
    %384 = vrot.lane.b32.xlu0 %v176, 113
    %v385 = vpop.permute.xlu0 %384
    %vm386 = vcmp.lt.s32.totalorder %v186, 113
    %v387 = vsel %vm386, %v383, %v385
    %v388 = vsel %vm386, %v381, %v383
    %v389 = vsel %vm386, %v379, %v381
    %v390 = vsel %vm386, %v385, %v379
    %s391 = scalar_lea.vmem [#allocation5], 6
    %v392 = vld [vmem:[%s391] ss:$8 sm:$0xf]
    %v394 = vlaneseq
    %v395 = vshrl.u32 %v394, 7
    %v396 = vsub.s32 0, %v395
    %v397 = vrot.slane %v392, %v396
    %v398 = vlaneseq
    %v399 = vshrl.u32 %v398, 7
    %v400 = vsub.s32 1, %v399
    %v401 = vrot.slane %v392, %v400
    %v402 = vlaneseq
    %v403 = vshrl.u32 %v402, 7
    %v404 = vsub.s32 2, %v403
    %v405 = vrot.slane %v392, %v404
    %v406 = vlaneseq
    %v407 = vshrl.u32 %v406, 7
    %v408 = vsub.s32 3, %v407
    %v409 = vrot.slane %v392, %v408
    %v414 = vmul.f32 %v389, %v397
    %v415 = vmul.f32 %v388, %v401
    %v416 = vmul.f32 %v387, %v405
    %v417 = vmul.f32 %v390, %v409
    %418 = vrot.lane.b32.xlu0 %v173, 112
    %v419 = vpop.permute.xlu0 %418
    %420 = vrot.lane.b32.xlu0 %v174, 112
    %v421 = vpop.permute.xlu0 %420
    %422 = vrot.lane.b32.xlu0 %v175, 112
    %v423 = vpop.permute.xlu0 %422
    %424 = vrot.lane.b32.xlu0 %v176, 112
    %v425 = vpop.permute.xlu0 %424
    %vm426 = vcmp.lt.s32.totalorder %v186, 112
    %v427 = vsel %vm426, %v423, %v425
    %v428 = vsel %vm426, %v421, %v423
    %v429 = vsel %vm426, %v419, %v421
    %v430 = vsel %vm426, %v425, %v419
    %s431 = scalar_lea.vmem [#allocation5], 7
    %v432 = vld [vmem:[%s431] ss:$8 sm:$0xf]
    %v434 = vlaneseq
    %v435 = vshrl.u32 %v434, 7
    %v436 = vsub.s32 0, %v435
    %v437 = vrot.slane %v432, %v436
    %v438 = vlaneseq
    %v439 = vshrl.u32 %v438, 7
    %v440 = vsub.s32 1, %v439
    %v441 = vrot.slane %v432, %v440
    %v442 = vlaneseq
    %v443 = vshrl.u32 %v442, 7
    %v444 = vsub.s32 2, %v443
    %v445 = vrot.slane %v432, %v444
    %v446 = vlaneseq
    %v447 = vshrl.u32 %v446, 7
    %v448 = vsub.s32 3, %v447
    %v449 = vrot.slane %v432, %v448
    %v454 = vmul.f32 %v429, %v437
    %v455 = vmul.f32 %v428, %v441
    %v456 = vmul.f32 %v427, %v445
    %v457 = vmul.f32 %v430, %v449
    %458 = vrot.lane.b32.xlu0 %v173, 111
    %v459 = vpop.permute.xlu0 %458
    %460 = vrot.lane.b32.xlu0 %v174, 111
    %v461 = vpop.permute.xlu0 %460
    %462 = vrot.lane.b32.xlu0 %v175, 111
    %v463 = vpop.permute.xlu0 %462
    %464 = vrot.lane.b32.xlu0 %v176, 111
    %v465 = vpop.permute.xlu0 %464
    %vm466 = vcmp.lt.s32.totalorder %v186, 111
    %v467 = vsel %vm466, %v463, %v465
    %v468 = vsel %vm466, %v461, %v463
    %v469 = vsel %vm466, %v459, %v461
    %v470 = vsel %vm466, %v465, %v459
    %s471 = scalar_lea.vmem [#allocation5], 32
    %v472 = vld [vmem:[%s471] ss:$8 sm:$0xf]
    %v474 = vlaneseq
    %v475 = vshrl.u32 %v474, 7
    %v476 = vsub.s32 0, %v475
    %v477 = vrot.slane %v472, %v476
    %v478 = vlaneseq
    %v479 = vshrl.u32 %v478, 7
    %v480 = vsub.s32 1, %v479
    %v481 = vrot.slane %v472, %v480
    %v482 = vlaneseq
    %v483 = vshrl.u32 %v482, 7
    %v484 = vsub.s32 2, %v483
    %v485 = vrot.slane %v472, %v484
    %v486 = vlaneseq
    %v487 = vshrl.u32 %v486, 7
    %v488 = vsub.s32 3, %v487
    %v489 = vrot.slane %v472, %v488
    %v494 = vmul.f32 %v469, %v477
    %v495 = vmul.f32 %v468, %v481
    %v496 = vmul.f32 %v467, %v485
    %v497 = vmul.f32 %v470, %v489
    %v502 = vrot.slane %v254, 6
    %v503 = vrot.slane %v255, 6
    %v504 = vrot.slane %v256, 6
    %v505 = vrot.slane %v257, 6
    %v514 = vrot.slane %v294, 4
    %v515 = vrot.slane %v295, 4
    %v516 = vrot.slane %v296, 4
    %v517 = vrot.slane %v297, 4
    %v526 = vrot.slane %v334, 2
    %v527 = vrot.slane %v335, 2
    %v528 = vrot.slane %v336, 2
    %v529 = vrot.slane %v337, 2
    %v538 = vrot.slane %v374, 6
    %v539 = vrot.slane %v375, 6
    %v540 = vrot.slane %v376, 6
    %v541 = vrot.slane %v377, 6
    %v550 = vrot.slane %v414, 4
    %v551 = vrot.slane %v415, 4
    %v552 = vrot.slane %v416, 4
    %v553 = vrot.slane %v417, 4
    %v562 = vrot.slane %v454, 2
    %v563 = vrot.slane %v455, 2
    %v564 = vrot.slane %v456, 2
    %v565 = vrot.slane %v457, 2
    %v570 = vsel %vm74, %v214, %v502
    %v571 = vsel %vm74, %v215, %v503
    %v572 = vsel %vm74, %v216, %v504
    %v573 = vsel %vm74, %v217, %v505
    %vm574 = vcmask 1043456
    %v575 = vsel %vm574, %v570, %v514
    %v576 = vsel %vm574, %v571, %v515
    %v577 = vsel %vm574, %v572, %v516
    %v578 = vsel %vm574, %v573, %v517
    %vm579 = vcmask 1045504
    %v580 = vsel %vm579, %v575, %v526
    %v581 = vsel %vm579, %v576, %v527
    %v582 = vsel %vm579, %v577, %v528
    %v583 = vsel %vm579, %v578, %v529
    %v584 = vsel %vm74, %v173, %v538
    %v585 = vsel %vm74, %v174, %v539
    %v586 = vsel %vm74, %v175, %v540
    %v587 = vsel %vm74, %v176, %v541
    %v588 = vsel %vm574, %v584, %v550
    %v589 = vsel %vm574, %v585, %v551
    %v590 = vsel %vm574, %v586, %v552
    %v591 = vsel %vm574, %v587, %v553
    %v592 = vsel %vm579, %v588, %v562
    %v593 = vsel %vm579, %v589, %v563
    %v594 = vsel %vm579, %v590, %v564
    %v595 = vsel %vm579, %v591, %v565
    %v596 = vpack.c.bf16 %v592, %v580
    %v597 = vpack.c.bf16 %v593, %v581
    %v598 = vpack.c.bf16 %v594, %v582
    %v599 = vpack.c.bf16 %v595, %v583
    %v600 = vpack.c.bf16 %v494, %v494
    %v601 = vpack.c.bf16 %v495, %v495
    %v602 = vpack.c.bf16 %v496, %v496
    %v603 = vpack.c.bf16 %v497, %v497
    %v604 = vld [vmem:[%s3] sm:$0x3]
    %v605 = vld [vmem:[%s4] sm:$0xf]
    %607 = vset.pattern.permute.xlu0 0
    %608 = vperm.xlu0 %607, %v605
    %v609 = vpop.permute.xlu0 %608
    %vm611 = vcmask 146432
    %v613 = vsel %vm611, %v604, 0
    %vm615 = vcmask 1040384
    %v617 = vsel %vm615, %v600, 0
    %v620 = vsel %vm615, %v601, 0
    %v623 = vsel %vm615, %v602, 0
    %v626 = vsel %vm615, %v603, 0
    %628 = vmatprep.subr.bf16.mxu0 0
    %629 = vmatpush1.bf16.msra.mxu0 0
    %630 = vmatprep.subr.bf16.mxu0 0
    %631 = vmatpush1.bf16.msra.mxu0 0
    %632 = vmatprep.subr.bf16.mxu0 0
    %633 = vmatpush1.bf16.msra.mxu0 0
    %634 = vmatprep.subr.bf16.mxu0 0
    %635 = vmatpush1.bf16.msra.mxu0 0
    %636 = vmatprep.subr.bf16.mxu0 0
    %637 = vmatpush1.bf16.msra.mxu0 0
    %638 = vmatprep.subr.bf16.mxu0 0
    %639 = vmatpush1.bf16.msra.mxu0 0
    %640 = vmatprep.subr.bf16.mxu0 %v620
    %641 = vmatpush1.bf16.msra.mxu0 %v617
    %642 = vmatprep.subr.bf16.mxu0 %v597
    %643 = vmatpush1.bf16.msra.mxu0 %v596
    %644 = vmatprep.subr.bf16.mxu0 0
    %645 = vmatpush2.bf16.msra.mxu0 0
    %646 = vmatprep.subr.bf16.mxu0 0
    %647 = vmatpush2.bf16.msra.mxu0 0
    %648 = vmatprep.subr.bf16.mxu0 0
    %649 = vmatpush2.bf16.msra.mxu0 0
    %650 = vmatprep.subr.bf16.mxu0 0
    %651 = vmatpush2.bf16.msra.mxu0 0
    %652 = vmatprep.subr.bf16.mxu0 0
    %653 = vmatpush2.bf16.msra.mxu0 0
    %654 = vmatprep.subr.bf16.mxu0 0
    %655 = vmatpush2.bf16.msra.mxu0 0
    %656 = vmatprep.subr.bf16.mxu0 0
    %657 = vmatpush2.bf16.msra.mxu0 0
    %658 = vmatprep.subr.bf16.mxu0 0
    %659 = vmatpush2.bf16.msra.mxu0 0
    %660 = vmatprep.mubr.bf16.mxu0 0
    %661 = vmatmul.mubr.bf16.gmra.mxu0 %v613
    %v662 = vpop.f32.mrf.mxu0
    %v663 = vadd.f32 %v609, %v662
    %v664 = vpop.f32.mrf.mxu0
    %v665 = vadd.f32 %v609, %v664
    %v666 = vpop.f32.mrf.mxu0
    %v667 = vpop.f32.mrf.mxu0
    %668 = vdwg.mxu0
    %669 = vmatprep.subr.bf16.mxu0 0
    %670 = vmatpush1.bf16.msra.mxu0 0
    %671 = vmatprep.subr.bf16.mxu0 0
    %672 = vmatpush1.bf16.msra.mxu0 0
    %673 = vmatprep.subr.bf16.mxu0 0
    %674 = vmatpush1.bf16.msra.mxu0 0
    %675 = vmatprep.subr.bf16.mxu0 0
    %676 = vmatpush1.bf16.msra.mxu0 0
    %677 = vmatprep.subr.bf16.mxu0 0
    %678 = vmatpush1.bf16.msra.mxu0 0
    %679 = vmatprep.subr.bf16.mxu0 0
    %680 = vmatpush1.bf16.msra.mxu0 0
    %681 = vmatprep.subr.bf16.mxu0 %v626
    %682 = vmatpush1.bf16.msra.mxu0 %v623
    %683 = vmatprep.subr.bf16.mxu0 %v599
    %684 = vmatpush1.bf16.msra.mxu0 %v598
    %685 = vmatprep.subr.bf16.mxu0 0
    %686 = vmatpush2.bf16.msra.mxu0 0
    %687 = vmatprep.subr.bf16.mxu0 0
    %688 = vmatpush2.bf16.msra.mxu0 0
    %689 = vmatprep.subr.bf16.mxu0 0
    %690 = vmatpush2.bf16.msra.mxu0 0
    %691 = vmatprep.subr.bf16.mxu0 0
    %692 = vmatpush2.bf16.msra.mxu0 0
    %693 = vmatprep.subr.bf16.mxu0 0
    %694 = vmatpush2.bf16.msra.mxu0 0
    %695 = vmatprep.subr.bf16.mxu0 0
    %696 = vmatpush2.bf16.msra.mxu0 0
    %697 = vmatprep.subr.bf16.mxu0 0
    %698 = vmatpush2.bf16.msra.mxu0 0
    %699 = vmatprep.subr.bf16.mxu0 0
    %700 = vmatpush2.bf16.msra.mxu0 0
    %701 = vmatprep.mubr.bf16.mxu0 0
    %702 = vmatmul.mubr.bf16.gmra.mxu0 %v613
    %v703 = vpop.f32.mrf.mxu0
    %v704 = vadd.f32 %v609, %v703
    %v705 = vpop.f32.mrf.mxu0
    %v706 = vadd.f32 %v609, %v705
    %v707 = vpop.f32.mrf.mxu0
    %v708 = vpop.f32.mrf.mxu0
    %709 = vdwg.mxu0
    %v710 = vmul.f32 %v663, 0.1
    %v711 = vmul.f32 %v665, 0.1
    %v712 = vmul.f32 %v704, 0.1
    %v713 = vmul.f32 %v706, 0.1
    %v714 = vmax.f32 %v663, %v710
    %v715 = vmax.f32 %v665, %v711
    %v716 = vmax.f32 %v704, %v712
    %v717 = vmax.f32 %v706, %v713
    %v718 = vadd.f32 %v714, %v51
    %v719 = vadd.f32 %v715, %v56
    %v720 = vadd.f32 %v716, %v52
    %v721 = vadd.f32 %v717, %v57
    %v726 = vcombine.low %v718, %v719
    %v727 = vcombine.low %v720, %v721
    %730 = vst [vmem:[#allocation7] sm:$0xff] %v726
    %731 = vst [vmem:[#allocation7 + $0x8] sm:$0xff] %v727
    // Predicated region
    $region34: #{tpu_custom_call.1} parent=1 // pred_check
      _
    $region35: #{tpu_custom_call.1} parent=1 // pred_check_branch
      %733 = sbr.rel (0) target = $region37
    $region36: #{tpu_custom_call.1} parent=1 // pred_region
      %s735 = ssub.s32 256, 256
      %736 = vsyncadd [#allocation4], %s735
      %s738 = sshll.u32 [#allocation7], 4
      %s739 = int_to_ptr.vmem [resolvable:$true] %s738
      %741 = dma.vmem_to_hbm [thread:$0]  %s739, 256, %s6, [#allocation4]
    $region37: #{tpu_custom_call.1} parent=1 // pred_fallthru
      _
    // Predicated region
    $region38: #{tpu_custom_call.1} parent=1 // pred_check
      _
    $region39: #{tpu_custom_call.1} parent=1 // pred_check_branch
      %743 = sbr.rel (0) target = $region41
    $region40: #{tpu_custom_call.1} parent=1 // pred_region
      %744 = dma.done [#allocation4], 256
    $region41: #{tpu_custom_call.1} parent=1 // pred_fallthru
      _
    %745 = vsyncpa [#allocation3], 1
    %746 = vsyncpa [#allocation6], 1
    %747 = vsyncpa [#allocation4], 1

</llo_original>
